<compile_context>
chip_gen: v7x
topology: tpu7x:2x2x1
jax: 0.10.0
libtpu: 0.0.40
codegen_flags: <defaults>
</compile_context>

<pallas_src>
import numpy as np
import jax
import jax.numpy as jnp
from jax import lax
from jax.experimental import pallas as pl
from jax.experimental.pallas import tpu as pltpu

# --- model hyper-parameters (from the reference script) ---
D_MODEL = 3
NUM_HEADS = 1          # single head -> head_dim == d_model
MAX_SEQ = 10
FFN_HIDDEN = 16
NUM_LAYERS = 12
DROP_PROB = 0.2        # TODO(synk): stochastic dropout has no clean Pallas equivalent; identity (eval mode)

MUSIC_LEN = 2
INPUT_DIM = MAX_SEQ * D_MODEL + MUSIC_LEN   # 32
MID1, MID2, FINAL = 16, 8, 4
EPS = 1e-5

# Packed per-sample activation block: x in rows 0..9 (cols 0..2), music column rows 10..11.
ACT_ROWS, ACT_COLS = 16, 4
# Packed parameter slab: everything co-packed into one (16, 128) f32 block (~8 KiB).
SLAB_ROWS, SLAB_COLS = 16, 128

# ---------------------------------------------------------------------------
# Compact parameter-slab layout: name -> (row, col, n_rows, n_cols)
# ---------------------------------------------------------------------------
_LAYOUT = {
    "pos":    (0,  0,  MAX_SEQ,    D_MODEL),
    "wo":     (10, 0,  D_MODEL,    D_MODEL),
    "bo":     (13, 0,  1,          D_MODEL),
    "g1":     (14, 0,  1,          D_MODEL),
    "be1":    (15, 0,  1,          D_MODEL),
    "w2":     (0,  3,  FFN_HIDDEN, D_MODEL),
    "wqkv":   (0,  8,  D_MODEL,    3 * D_MODEL),
    "bqkv":   (3,  8,  1,          3 * D_MODEL),
    "bb2":    (4,  8,  1,          D_MODEL),
    "g2":     (4,  11, 1,          D_MODEL),
    "be2":    (4,  14, 1,          D_MODEL),
    "cb3":    (5,  8,  1,          FINAL),
    "cw3":    (8,  8,  MID2,       FINAL),
    "w1":     (0,  20, D_MODEL,    FFN_HIDDEN),
    "bb1":    (3,  20, 1,          FFN_HIDDEN),
    "cw1m":   (4,  20, MUSIC_LEN,  MID1),
    "cb1":    (6,  20, 1,          MID1),
    "cb2":    (7,  20, 1,          MID2),
    "wpk":    (0,  36, MAX_SEQ,    D_MODEL * MID1),
    "expand": (10, 36, D_MODEL,    D_MODEL * MID1),
    "cw2":    (0,  84, MID1,       MID2),
}


def _check_layout():
    occ = np.zeros((SLAB_ROWS, SLAB_COLS), dtype=bool)
    for name, (r, c, nr, nc) in _LAYOUT.items():
        assert r + nr <= SLAB_ROWS and c + nc <= SLAB_COLS, name
        assert not occ[r:r + nr, c:c + nc].any(), f"slab overlap at {name}"
        occ[r:r + nr, c:c + nc] = True


_check_layout()


def _p(p_ref, name):
    """Static-slice one parameter out of the packed slab."""
    r, c, nr, nc = _LAYOUT[name]
    return p_ref[r:r + nr, c:c + nc]


# ---------------------------------------------------------------------------
# Fused kernel (one sample per grid step):
# (x+pos) -> MHA -> add&LN -> FFN -> add&LN -> flatten/cat (implicit) -> 3-layer MLP
# ---------------------------------------------------------------------------
def daum1_kernel(act_ref, p_ref, out_ref):
    act = act_ref[...]                                        # (16, 4)
    xp = act[0:MAX_SEQ, 0:D_MODEL] + _p(p_ref, "pos")         # (S, D)

    # --- multi-head attention (num_heads == 1, mask is None) ---
    qkv = jnp.dot(xp, _p(p_ref, "wqkv"),
                  preferred_element_type=jnp.float32) + _p(p_ref, "bqkv")   # (S, 3D)
    q = qkv[:, 0:D_MODEL]
    k = qkv[:, D_MODEL:2 * D_MODEL]
    v = qkv[:, 2 * D_MODEL:3 * D_MODEL]
    # TODO(synk): at D=3 these dots are MXU-padded; a VPU broadcast-MAC variant may be
    # shorter on v5e/v6e (needs a bundle-dump audit) -- kept on the MXU for clarity.
    scores = lax.dot_general(q, k, (((1,), (1,)), ((), ())),
                             preferred_element_type=jnp.float32)
    scores = scores * (1.0 / float(np.sqrt(D_MODEL)))                       # (S, S)
    m = jnp.max(scores, axis=-1, keepdims=True)
    e = jnp.exp(scores - m)
    attn = e / jnp.sum(e, axis=-1, keepdims=True)             # exact softmax
    vals = jnp.dot(attn, v, preferred_element_type=jnp.float32)             # (S, D)
    mha = jnp.dot(vals, _p(p_ref, "wo"),
                  preferred_element_type=jnp.float32) + _p(p_ref, "bo")

    # --- residual + LayerNorm over d_model ---
    res1 = xp + mha
    mean1 = jnp.mean(res1, axis=-1, keepdims=True)
    var1 = jnp.mean((res1 - mean1) ** 2, axis=-1, keepdims=True)
    ln1 = _p(p_ref, "g1") * ((res1 - mean1) * lax.rsqrt(var1 + EPS)) + _p(p_ref, "be1")

    # --- position-wise feed-forward ---
    h = jnp.maximum(jnp.dot(ln1, _p(p_ref, "w1"),
                            preferred_element_type=jnp.float32) + _p(p_ref, "bb1"), 0.0)
    ffn = jnp.dot(h, _p(p_ref, "w2"),
                  preferred_element_type=jnp.float32) + _p(p_ref, "bb2")

    res2 = ffn + ln1
    mean2 = jnp.mean(res2, axis=-1, keepdims=True)
    var2 = jnp.mean((res2 - mean2) ** 2, axis=-1, keepdims=True)
    ln2 = _p(p_ref, "g2") * ((res2 - mean2) * lax.rsqrt(var2 + EPS)) + _p(p_ref, "be2")

    # --- combiner layer 1: [flatten(ln2), music] @ W1 + b1, collapsed into ONE
    #     expand-matmul + elementwise multiply + ONE sublane reduction.
    #     wpk[i, j*MID1 + m] == W1[3*i + j, m];  expand[j, j*MID1 + m] == 1.
    lexp = jnp.dot(ln2, _p(p_ref, "expand"),
                   preferred_element_type=jnp.float32)                      # (S, 3*MID1)
    red = jnp.sum(lexp * _p(p_ref, "wpk"), axis=0, keepdims=True)           # (1, 3*MID1)
    mus = act[MAX_SEQ:MAX_SEQ + MUSIC_LEN, 0:1]                             # (2, 1)
    mcon = jnp.sum(mus * _p(p_ref, "cw1m"), axis=0, keepdims=True)          # (1, MID1)
    h1 = (red[:, 0:MID1] + red[:, MID1:2 * MID1] + red[:, 2 * MID1:3 * MID1]
          + mcon + _p(p_ref, "cb1"))
    h1 = jnp.maximum(h1, 0.0)                                               # (1, MID1)

    h2 = jnp.maximum(jnp.dot(h1, _p(p_ref, "cw2"),
                             preferred_element_type=jnp.float32) + _p(p_ref, "cb2"), 0.0)

    out_ref[...] = (jnp.dot(h2, _p(p_ref, "cw3"),
                            preferred_element_type=jnp.float32) + _p(p_ref, "cb3"))


def _make_call(batch):
    return pl.pallas_call(
        daum1_kernel,
        out_shape=jax.ShapeDtypeStruct((batch, 1, FINAL), jnp.float32),
        grid=(batch,),
        in_specs=[
            pl.BlockSpec((None, ACT_ROWS, ACT_COLS), lambda b: (b, 0, 0)),
            pl.BlockSpec((SLAB_ROWS, SLAB_COLS), lambda b: (0, 0)),   # constant -> fetched once
        ],
        out_specs=pl.BlockSpec((None, 1, FINAL), lambda b: (b, 0, 0)),
        compiler_params=pltpu.CompilerParams(dimension_semantics=("parallel",)),
    )


@jax.jit
def daum1_forward(xb, musicb, slab):
    """Batched forward. xb: (B, MAX_SEQ, D_MODEL); musicb: (B, MUSIC_LEN)."""
    batch = xb.shape[0]
    act = jnp.zeros((batch, ACT_ROWS, ACT_COLS), jnp.float32)
    act = act.at[:, 0:MAX_SEQ, 0:D_MODEL].set(xb.astype(jnp.float32))
    act = act.at[:, MAX_SEQ:MAX_SEQ + MUSIC_LEN, 0].set(musicb.astype(jnp.float32))
    out = _make_call(batch)(act, slab)
    return out[:, 0, :]


# ---------------------------------------------------------------------------
# Parameter init / packing (host-side, once)
# ---------------------------------------------------------------------------
def positional_encoding(d_model, max_len):
    i = jnp.arange(d_model, dtype=jnp.float32)
    denom = jnp.power(10000.0, i / d_model)
    pos = jnp.arange(max_len, dtype=jnp.float32).reshape(max_len, 1)
    return jnp.sin(pos / denom)          # sin-only, exactly as the reference


def linear_params(key, fan_in, fan_out):
    kw, kb = jax.random.split(key)
    bound = 1.0 / np.sqrt(fan_in)
    w = jax.random.uniform(kw, (fan_in, fan_out), jnp.float32, -bound, bound)
    b = jax.random.uniform(kb, (1, fan_out), jnp.float32, -bound, bound)
    return w, b


def init_encoder_layer(key):
    k1, k2, k3, k4 = jax.random.split(key, 4)
    wqkv, bqkv = linear_params(k1, D_MODEL, 3 * D_MODEL)
    wo, bo = linear_params(k2, D_MODEL, D_MODEL)
    w1, bb1 = linear_params(k3, D_MODEL, FFN_HIDDEN)
    w2, bb2 = linear_params(k4, FFN_HIDDEN, D_MODEL)
    ones = jnp.ones((1, D_MODEL), jnp.float32)
    zeros = jnp.zeros((1, D_MODEL), jnp.float32)
    return dict(wqkv=wqkv, bqkv=bqkv, wo=wo, bo=bo,
                g1=ones, be1=zeros, w1=w1, bb1=bb1, w2=w2, bb2=bb2,
                g2=ones, be2=zeros)


def init_combiner(key):
    k1, k2, k3 = jax.random.split(key, 3)
    w1, b1 = linear_params(k1, INPUT_DIM, MID1)
    w2, b2 = linear_params(k2, MID1, MID2)
    w3, b3 = linear_params(k3, MID2, FINAL)
    return dict(w1=w1, b1=b1, w2=w2, b2=b2, w3=w3, b3=b3)


def pack_slab(enc_last, comb):
    """Pack pos + last encoder layer + combiner params into one compact (16,128) slab."""
    vals = dict(enc_last)
    vals["pos"] = positional_encoding(D_MODEL, MAX_SEQ)
    flat_rows = MAX_SEQ * D_MODEL
    # wpk[i, j*MID1 + m] = W1[3*i + j, m]
    vals["wpk"] = comb["w1"][:flat_rows, :].reshape(MAX_SEQ, D_MODEL * MID1)
    vals["cw1m"] = comb["w1"][flat_rows:, :]
    vals["cb1"] = comb["b1"]
    vals["cw2"], vals["cb2"] = comb["w2"], comb["b2"]
    vals["cw3"], vals["cb3"] = comb["w3"], comb["b3"]
    expand = np.zeros((D_MODEL, D_MODEL * MID1), np.float32)
    for j in range(D_MODEL):
        expand[j, j * MID1:(j + 1) * MID1] = 1.0
    vals["expand"] = jnp.asarray(expand)

    slab = jnp.zeros((SLAB_ROWS, SLAB_COLS), jnp.float32)
    for name, (r, c, nr, nc) in _LAYOUT.items():
        slab = slab.at[r:r + nr, c:c + nc].set(
            jnp.asarray(vals[name], jnp.float32).reshape(nr, nc))
    return slab


# ---------------------------------------------------------------------------
# Pure-JAX reference (original, un-fused semantics) for a sanity check
# ---------------------------------------------------------------------------
def _layer_norm(x, gamma, beta):
    mean = jnp.mean(x, axis=-1, keepdims=True)
    var = jnp.mean((x - mean) ** 2, axis=-1, keepdims=True)
    return gamma * ((x - mean) / jnp.sqrt(var + EPS)) + beta


def daum1_reference(x, music_params, enc_layers, comb):
    pos = positional_encoding(D_MODEL, MAX_SEQ)
    out = x
    for p in enc_layers:                       # every layer re-reads the ORIGINAL x
        xp = x + pos
        qkv = xp @ p["wqkv"] + p["bqkv"]
        q, k, v = qkv[:, :D_MODEL], qkv[:, D_MODEL:2 * D_MODEL], qkv[:, 2 * D_MODEL:]
        s = (q @ k.T) / np.sqrt(D_MODEL)
        a = jax.nn.softmax(s, axis=-1)
        mha = (a @ v) @ p["wo"] + p["bo"]
        ln1 = _layer_norm(xp + mha, p["g1"], p["be1"])
        h = jax.nn.relu(ln1 @ p["w1"] + p["bb1"])
        ffn = h @ p["w2"] + p["bb2"]
        out = _layer_norm(ffn + ln1, p["g2"], p["be2"])
    cat = jnp.concatenate([out.reshape(-1), music_params.astype(jnp.float32)])
    h1 = jax.nn.relu(cat @ comb["w1"] + comb["b1"][0])
    h2 = jax.nn.relu(h1 @ comb["w2"] + comb["b2"][0])
    return h2 @ comb["w3"] + comb["b3"][0]


# ---------------------------------------------------------------------------
if __name__ == "__main__":
    root = jax.random.PRNGKey(0)
    k_x, k_music, k_comb, *k_layers = jax.random.split(root, 3 + NUM_LAYERS)

    BATCH = 8
    xb = jax.random.normal(k_x, (BATCH, MAX_SEQ, D_MODEL), jnp.float32)
    musicb = jax.random.normal(k_music, (BATCH, MUSIC_LEN), jnp.float32)

    # All 12 layers initialised for model fidelity, but layers 0..10 are provably dead
    # in the reference forward (each layer recomputes from the original x); the fused
    # kernel therefore packs only enc_layers[-1].
    enc_layers = [init_encoder_layer(k) for k in k_layers]
    comb_params = init_combiner(k_comb)
    slab = pack_slab(enc_layers[-1], comb_params)

    out = daum1_forward(xb, musicb, slab)
    jax.block_until_ready(out)
    assert out.shape == (BATCH, FINAL)

    for b in range(BATCH):
        ref = daum1_reference(xb[b], musicb[b], enc_layers, comb_params)
        assert jnp.allclose(out[b], ref, rtol=1e-2, atol=1e-2), (b, out[b], ref)

    print("KERNEL_OK")
</pallas_src>

<mosaic_0001>
module attributes {stable_mosaic.version = 11 : i64} {
  func.func @daum1_kernel(%arg0: i32, %arg1: memref<1x16x4xf32, #tpu.memory_space<vmem>>, %arg2: memref<16x128xf32, #tpu.memory_space<vmem>>, %arg3: memref<1x1x4xf32, #tpu.memory_space<vmem>>) attributes {dimension_semantics = [#tpu.dimension_semantics<parallel>], iteration_bounds = array<i64: 8>, scalar_prefetch = 0 : i64, scratch_operands = 0 : i64, tpu.core_type = #tpu.core_type<tc>, window_params = [{transform_indices = @transform_0, window_bounds = array<i64: 1, 16, 4>}, {pipeline_mode = #tpu.pipeline_mode<synchronous>, transform_indices = @transform_1, window_bounds = array<i64: 16, 128>}, {transform_indices = @transform_2, window_bounds = array<i64: 1, 1, 4>}]} {
    %c0 = arith.constant 0 : index
    %c0_0 = arith.constant 0 : index
    %c0_1 = arith.constant 0 : index
    %0 = vector.load %arg1[%c0, %c0_0, %c0_1] : memref<1x16x4xf32, #tpu.memory_space<vmem>>, vector<1x16x4xf32>
    %1 = vector.shape_cast %0 : vector<1x16x4xf32> to vector<16x4xf32>
    %2 = vector.extract_strided_slice %1 {offsets = [0, 0], sizes = [10, 3], strides = [1, 1]} : vector<16x4xf32> to vector<10x3xf32>
    %c0_2 = arith.constant 0 : index
    %c0_3 = arith.constant 0 : index
    %3 = vector.load %arg2[%c0_2, %c0_3] : memref<16x128xf32, #tpu.memory_space<vmem>>, vector<10x3xf32>
    %4 = arith.addf %2, %3 : vector<10x3xf32>
    %c0_4 = arith.constant 0 : index
    %c8 = arith.constant 8 : index
    %5 = vector.load %arg2[%c0_4, %c8] : memref<16x128xf32, #tpu.memory_space<vmem>>, vector<3x9xf32>
    %cst = arith.constant dense<0.000000e+00> : vector<10x9xf32>
    %6 = tpu.matmul %4, %5, %cst {dimension_numbers = #tpu.dot_dimension_numbers<[1], [0], [0], [1], [0, 0, 1, 1], [], []>} : vector<10x3xf32>, vector<3x9xf32>, vector<10x9xf32> -> vector<10x9xf32>
    %c3 = arith.constant 3 : index
    %c8_5 = arith.constant 8 : index
    %7 = vector.load %arg2[%c3, %c8_5] : memref<16x128xf32, #tpu.memory_space<vmem>>, vector<1x9xf32>
    %8 = vector.broadcast %7 : vector<1x9xf32> to vector<10x9xf32>
    %9 = arith.addf %6, %8 : vector<10x9xf32>
    %10 = vector.extract_strided_slice %9 {offsets = [0, 0], sizes = [10, 3], strides = [1, 1]} : vector<10x9xf32> to vector<10x3xf32>
    %11 = vector.extract_strided_slice %9 {offsets = [0, 3], sizes = [10, 3], strides = [1, 1]} : vector<10x9xf32> to vector<10x3xf32>
    %12 = vector.extract_strided_slice %9 {offsets = [0, 6], sizes = [10, 3], strides = [1, 1]} : vector<10x9xf32> to vector<10x3xf32>
    %cst_6 = arith.constant dense<0.000000e+00> : vector<10x10xf32>
    %13 = tpu.matmul %10, %11, %cst_6 {dimension_numbers = #tpu.dot_dimension_numbers<[1], [1], [0], [0], [0, 0, 1, 0], [], []>} : vector<10x3xf32>, vector<10x3xf32>, vector<10x10xf32> -> vector<10x10xf32>
    %cst_7 = arith.constant 0.577350259 : f32
    %14 = vector.broadcast %cst_7 : f32 to vector<10x10xf32>
    %15 = arith.mulf %13, %14 : vector<10x10xf32>
    %cst_8 = arith.constant dense<0xFF800000> : vector<10xf32>
    %16 = vector.multi_reduction <maximumf>, %15, %cst_8 [1] : vector<10x10xf32> to vector<10xf32>
    %17 = vector.shape_cast %16 : vector<10xf32> to vector<10x1xf32>
    %18 = vector.broadcast %17 : vector<10x1xf32> to vector<10x10xf32>
    %19 = arith.subf %15, %18 : vector<10x10xf32>
    %20 = math.exp %19 : vector<10x10xf32>
    %cst_9 = arith.constant dense<0.000000e+00> : vector<10xf32>
    %21 = vector.multi_reduction <add>, %20, %cst_9 [1] : vector<10x10xf32> to vector<10xf32>
    %22 = vector.shape_cast %21 : vector<10xf32> to vector<10x1xf32>
    %23 = vector.broadcast %22 : vector<10x1xf32> to vector<10x10xf32>
    %24 = arith.divf %20, %23 : vector<10x10xf32>
    %cst_10 = arith.constant dense<0.000000e+00> : vector<10x3xf32>
    %25 = tpu.matmul %24, %12, %cst_10 {dimension_numbers = #tpu.dot_dimension_numbers<[1], [0], [0], [1], [0, 0, 1, 1], [], []>} : vector<10x10xf32>, vector<10x3xf32>, vector<10x3xf32> -> vector<10x3xf32>
    %c10 = arith.constant 10 : index
    %c0_11 = arith.constant 0 : index
    %26 = vector.load %arg2[%c10, %c0_11] : memref<16x128xf32, #tpu.memory_space<vmem>>, vector<3x3xf32>
    %cst_12 = arith.constant dense<0.000000e+00> : vector<10x3xf32>
    %27 = tpu.matmul %25, %26, %cst_12 {dimension_numbers = #tpu.dot_dimension_numbers<[1], [0], [0], [1], [0, 0, 1, 1], [], []>} : vector<10x3xf32>, vector<3x3xf32>, vector<10x3xf32> -> vector<10x3xf32>
    %c13 = arith.constant 13 : index
    %c0_13 = arith.constant 0 : index
    %28 = vector.load %arg2[%c13, %c0_13] : memref<16x128xf32, #tpu.memory_space<vmem>>, vector<1x3xf32>
    %29 = vector.broadcast %28 : vector<1x3xf32> to vector<10x3xf32>
    %30 = arith.addf %27, %29 : vector<10x3xf32>
    %31 = arith.addf %4, %30 : vector<10x3xf32>
    %cst_14 = arith.constant dense<0.000000e+00> : vector<10xf32>
    %32 = vector.multi_reduction <add>, %31, %cst_14 [1] : vector<10x3xf32> to vector<10xf32>
    %33 = vector.shape_cast %32 : vector<10xf32> to vector<10x1xf32>
    %cst_15 = arith.constant 3.000000e+00 : f32
    %34 = vector.broadcast %cst_15 : f32 to vector<10x1xf32>
    %35 = arith.divf %33, %34 : vector<10x1xf32>
    %36 = vector.broadcast %35 : vector<10x1xf32> to vector<10x3xf32>
    %37 = arith.subf %31, %36 : vector<10x3xf32>
    %38 = arith.mulf %37, %37 : vector<10x3xf32>
    %cst_16 = arith.constant dense<0.000000e+00> : vector<10xf32>
    %39 = vector.multi_reduction <add>, %38, %cst_16 [1] : vector<10x3xf32> to vector<10xf32>
    %40 = vector.shape_cast %39 : vector<10xf32> to vector<10x1xf32>
    %cst_17 = arith.constant 3.000000e+00 : f32
    %41 = vector.broadcast %cst_17 : f32 to vector<10x1xf32>
    %42 = arith.divf %40, %41 : vector<10x1xf32>
    %c14 = arith.constant 14 : index
    %c0_18 = arith.constant 0 : index
    %43 = vector.load %arg2[%c14, %c0_18] : memref<16x128xf32, #tpu.memory_space<vmem>>, vector<1x3xf32>
    %44 = vector.broadcast %35 : vector<10x1xf32> to vector<10x3xf32>
    %45 = arith.subf %31, %44 : vector<10x3xf32>
    %cst_19 = arith.constant 9.99999974E-6 : f32
    %46 = vector.broadcast %cst_19 : f32 to vector<10x1xf32>
    %47 = arith.addf %42, %46 : vector<10x1xf32>
    %48 = math.rsqrt %47 : vector<10x1xf32>
    %49 = vector.broadcast %48 : vector<10x1xf32> to vector<10x3xf32>
    %50 = arith.mulf %45, %49 : vector<10x3xf32>
    %51 = vector.broadcast %43 : vector<1x3xf32> to vector<10x3xf32>
    %52 = arith.mulf %51, %50 : vector<10x3xf32>
    %c15 = arith.constant 15 : index
    %c0_20 = arith.constant 0 : index
    %53 = vector.load %arg2[%c15, %c0_20] : memref<16x128xf32, #tpu.memory_space<vmem>>, vector<1x3xf32>
    %54 = vector.broadcast %53 : vector<1x3xf32> to vector<10x3xf32>
    %55 = arith.addf %52, %54 : vector<10x3xf32>
    %c0_21 = arith.constant 0 : index
    %c20 = arith.constant 20 : index
    %56 = vector.load %arg2[%c0_21, %c20] : memref<16x128xf32, #tpu.memory_space<vmem>>, vector<3x16xf32>
    %cst_22 = arith.constant dense<0.000000e+00> : vector<10x16xf32>
    %57 = tpu.matmul %55, %56, %cst_22 {dimension_numbers = #tpu.dot_dimension_numbers<[1], [0], [0], [1], [0, 0, 1, 1], [], []>} : vector<10x3xf32>, vector<3x16xf32>, vector<10x16xf32> -> vector<10x16xf32>
    %c3_23 = arith.constant 3 : index
    %c20_24 = arith.constant 20 : index
    %58 = vector.load %arg2[%c3_23, %c20_24] : memref<16x128xf32, #tpu.memory_space<vmem>>, vector<1x16xf32>
    %59 = vector.broadcast %58 : vector<1x16xf32> to vector<10x16xf32>
    %60 = arith.addf %57, %59 : vector<10x16xf32>
    %cst_25 = arith.constant 0.000000e+00 : f32
    %61 = vector.broadcast %cst_25 : f32 to vector<10x16xf32>
    %62 = arith.maximumf %60, %61 : vector<10x16xf32>
    %c0_26 = arith.constant 0 : index
    %c3_27 = arith.constant 3 : index
    %63 = vector.load %arg2[%c0_26, %c3_27] : memref<16x128xf32, #tpu.memory_space<vmem>>, vector<16x3xf32>
    %cst_28 = arith.constant dense<0.000000e+00> : vector<10x3xf32>
    %64 = tpu.matmul %62, %63, %cst_28 {dimension_numbers = #tpu.dot_dimension_numbers<[1], [0], [0], [1], [0, 0, 1, 1], [], []>} : vector<10x16xf32>, vector<16x3xf32>, vector<10x3xf32> -> vector<10x3xf32>
    %c4 = arith.constant 4 : index
    %c8_29 = arith.constant 8 : index
    %65 = vector.load %arg2[%c4, %c8_29] : memref<16x128xf32, #tpu.memory_space<vmem>>, vector<1x3xf32>
    %66 = vector.broadcast %65 : vector<1x3xf32> to vector<10x3xf32>
    %67 = arith.addf %64, %66 : vector<10x3xf32>
    %68 = arith.addf %67, %55 : vector<10x3xf32>
    %cst_30 = arith.constant dense<0.000000e+00> : vector<10xf32>
    %69 = vector.multi_reduction <add>, %68, %cst_30 [1] : vector<10x3xf32> to vector<10xf32>
    %70 = vector.shape_cast %69 : vector<10xf32> to vector<10x1xf32>
    %cst_31 = arith.constant 3.000000e+00 : f32
    %71 = vector.broadcast %cst_31 : f32 to vector<10x1xf32>
    %72 = arith.divf %70, %71 : vector<10x1xf32>
    %73 = vector.broadcast %72 : vector<10x1xf32> to vector<10x3xf32>
    %74 = arith.subf %68, %73 : vector<10x3xf32>
    %75 = arith.mulf %74, %74 : vector<10x3xf32>
    %cst_32 = arith.constant dense<0.000000e+00> : vector<10xf32>
    %76 = vector.multi_reduction <add>, %75, %cst_32 [1] : vector<10x3xf32> to vector<10xf32>
    %77 = vector.shape_cast %76 : vector<10xf32> to vector<10x1xf32>
    %cst_33 = arith.constant 3.000000e+00 : f32
    %78 = vector.broadcast %cst_33 : f32 to vector<10x1xf32>
    %79 = arith.divf %77, %78 : vector<10x1xf32>
    %c4_34 = arith.constant 4 : index
    %c11 = arith.constant 11 : index
    %80 = vector.load %arg2[%c4_34, %c11] : memref<16x128xf32, #tpu.memory_space<vmem>>, vector<1x3xf32>
    %81 = vector.broadcast %72 : vector<10x1xf32> to vector<10x3xf32>
    %82 = arith.subf %68, %81 : vector<10x3xf32>
    %cst_35 = arith.constant 9.99999974E-6 : f32
    %83 = vector.broadcast %cst_35 : f32 to vector<10x1xf32>
    %84 = arith.addf %79, %83 : vector<10x1xf32>
    %85 = math.rsqrt %84 : vector<10x1xf32>
    %86 = vector.broadcast %85 : vector<10x1xf32> to vector<10x3xf32>
    %87 = arith.mulf %82, %86 : vector<10x3xf32>
    %88 = vector.broadcast %80 : vector<1x3xf32> to vector<10x3xf32>
    %89 = arith.mulf %88, %87 : vector<10x3xf32>
    %c4_36 = arith.constant 4 : index
    %c14_37 = arith.constant 14 : index
    %90 = vector.load %arg2[%c4_36, %c14_37] : memref<16x128xf32, #tpu.memory_space<vmem>>, vector<1x3xf32>
    %91 = vector.broadcast %90 : vector<1x3xf32> to vector<10x3xf32>
    %92 = arith.addf %89, %91 : vector<10x3xf32>
    %c10_38 = arith.constant 10 : index
    %c36 = arith.constant 36 : index
    %93 = vector.load %arg2[%c10_38, %c36] : memref<16x128xf32, #tpu.memory_space<vmem>>, vector<3x48xf32>
    %cst_39 = arith.constant dense<0.000000e+00> : vector<10x48xf32>
    %94 = tpu.matmul %92, %93, %cst_39 {dimension_numbers = #tpu.dot_dimension_numbers<[1], [0], [0], [1], [0, 0, 1, 1], [], []>} : vector<10x3xf32>, vector<3x48xf32>, vector<10x48xf32> -> vector<10x48xf32>
    %c0_40 = arith.constant 0 : index
    %c36_41 = arith.constant 36 : index
    %95 = vector.load %arg2[%c0_40, %c36_41] : memref<16x128xf32, #tpu.memory_space<vmem>>, vector<10x48xf32>
    %96 = arith.mulf %94, %95 : vector<10x48xf32>
    %cst_42 = arith.constant dense<0.000000e+00> : vector<48xf32>
    %97 = vector.multi_reduction <add>, %96, %cst_42 [0] : vector<10x48xf32> to vector<48xf32>
    %98 = vector.shape_cast %97 : vector<48xf32> to vector<1x48xf32>
    %99 = vector.extract_strided_slice %1 {offsets = [10, 0], sizes = [2, 1], strides = [1, 1]} : vector<16x4xf32> to vector<2x1xf32>
    %c4_43 = arith.constant 4 : index
    %c20_44 = arith.constant 20 : index
    %100 = vector.load %arg2[%c4_43, %c20_44] : memref<16x128xf32, #tpu.memory_space<vmem>>, vector<2x16xf32>
    %101 = vector.broadcast %99 : vector<2x1xf32> to vector<2x16xf32>
    %102 = arith.mulf %101, %100 : vector<2x16xf32>
    %cst_45 = arith.constant dense<0.000000e+00> : vector<16xf32>
    %103 = vector.multi_reduction <add>, %102, %cst_45 [0] : vector<2x16xf32> to vector<16xf32>
    %104 = vector.shape_cast %103 : vector<16xf32> to vector<1x16xf32>
    %105 = vector.extract_strided_slice %98 {offsets = [0, 0], sizes = [1, 16], strides = [1, 1]} : vector<1x48xf32> to vector<1x16xf32>
    %106 = vector.extract_strided_slice %98 {offsets = [0, 16], sizes = [1, 16], strides = [1, 1]} : vector<1x48xf32> to vector<1x16xf32>
    %107 = arith.addf %105, %106 : vector<1x16xf32>
    %108 = vector.extract_strided_slice %98 {offsets = [0, 32], sizes = [1, 16], strides = [1, 1]} : vector<1x48xf32> to vector<1x16xf32>
    %109 = arith.addf %107, %108 : vector<1x16xf32>
    %110 = arith.addf %109, %104 : vector<1x16xf32>
    %c6 = arith.constant 6 : index
    %c20_46 = arith.constant 20 : index
    %111 = vector.load %arg2[%c6, %c20_46] : memref<16x128xf32, #tpu.memory_space<vmem>>, vector<1x16xf32>
    %112 = arith.addf %110, %111 : vector<1x16xf32>
    %cst_47 = arith.constant 0.000000e+00 : f32
    %113 = vector.broadcast %cst_47 : f32 to vector<1x16xf32>
    %114 = arith.maximumf %112, %113 : vector<1x16xf32>
    %c0_48 = arith.constant 0 : index
    %c84 = arith.constant 84 : index
    %115 = vector.load %arg2[%c0_48, %c84] : memref<16x128xf32, #tpu.memory_space<vmem>>, vector<16x8xf32>
    %cst_49 = arith.constant dense<0.000000e+00> : vector<1x8xf32>
    %116 = tpu.matmul %114, %115, %cst_49 {dimension_numbers = #tpu.dot_dimension_numbers<[1], [0], [0], [1], [0, 0, 1, 1], [], []>} : vector<1x16xf32>, vector<16x8xf32>, vector<1x8xf32> -> vector<1x8xf32>
    %c7 = arith.constant 7 : index
    %c20_50 = arith.constant 20 : index
    %117 = vector.load %arg2[%c7, %c20_50] : memref<16x128xf32, #tpu.memory_space<vmem>>, vector<1x8xf32>
    %118 = arith.addf %116, %117 : vector<1x8xf32>
    %cst_51 = arith.constant 0.000000e+00 : f32
    %119 = vector.broadcast %cst_51 : f32 to vector<1x8xf32>
    %120 = arith.maximumf %118, %119 : vector<1x8xf32>
    %c8_52 = arith.constant 8 : index
    %c8_53 = arith.constant 8 : index
    %121 = vector.load %arg2[%c8_52, %c8_53] : memref<16x128xf32, #tpu.memory_space<vmem>>, vector<8x4xf32>
    %cst_54 = arith.constant dense<0.000000e+00> : vector<1x4xf32>
    %122 = tpu.matmul %120, %121, %cst_54 {dimension_numbers = #tpu.dot_dimension_numbers<[1], [0], [0], [1], [0, 0, 1, 1], [], []>} : vector<1x8xf32>, vector<8x4xf32>, vector<1x4xf32> -> vector<1x4xf32>
    %c5 = arith.constant 5 : index
    %c8_55 = arith.constant 8 : index
    %123 = vector.load %arg2[%c5, %c8_55] : memref<16x128xf32, #tpu.memory_space<vmem>>, vector<1x4xf32>
    %124 = arith.addf %122, %123 : vector<1x4xf32>
    %c0_56 = arith.constant 0 : index
    %c0_57 = arith.constant 0 : index
    %c0_58 = arith.constant 0 : index
    %125 = vector.load %arg3[%c0_56, %c0_57, %c0_58] : memref<1x1x4xf32, #tpu.memory_space<vmem>>, vector<1x1x4xf32>
    %126 = vector.shape_cast %125 : vector<1x1x4xf32> to vector<1x4xf32>
    %127 = vector.shape_cast %124 : vector<1x4xf32> to vector<1x1x4xf32>
    tpu.vector_store %arg3[%c0_56, %c0_57, %c0_58], %127 {strides = array<i32>} : memref<1x1x4xf32, #tpu.memory_space<vmem>>, vector<1x1x4xf32>,
    return
  }
  func.func @transform_0(%arg0: i32) -> (i32, i32, i32) {
    %c0_i32 = arith.constant 0 : i32
    %c0_i32_0 = arith.constant 0 : i32
    %c0_i32_1 = arith.constant 0 : i32
    return %arg0, %c0_i32, %c0_i32_0 : i32, i32, i32
  }
  func.func @transform_1(%arg0: i32) -> (i32, i32) {
    %c0_i32 = arith.constant 0 : i32
    %c0_i32_0 = arith.constant 0 : i32
    %c0_i32_1 = arith.constant 0 : i32
    return %c0_i32, %c0_i32_0 : i32, i32
  }
  func.func @transform_2(%arg0: i32) -> (i32, i32, i32) {
    %c0_i32 = arith.constant 0 : i32
    %c0_i32_0 = arith.constant 0 : i32
    %c0_i32_1 = arith.constant 0 : i32
    return %arg0, %c0_i32, %c0_i32_0 : i32, i32, i32
  }
}

</mosaic_0001>

<llo_original>
// kernel: daum1_forward.1
$region0: #{daum1_forward.1}
  #allocation0 [shape = 'u32[]', space=smem, size = 0x4, offset = 0x4, fixed_abs, tag = 'smem constant byte address 0x4 - core index']
  #allocation1 [shape = 'u32[144,128]{1,0:T(1,128)}', space=vmem, size = 0x12000, scoped, tag = 'internal scratch']
  %s0 = inlined_call_operand.vmem [shape: f32[8,16,4], index: 0, kind: input, shape index: {}]
  %s1 = inlined_call_operand.vmem [shape: f32[16,128], index: 1, kind: input, shape index: {}]
  %s2 = inlined_call_operand.vmem [shape: f32[8,1,4], index: 2, kind: output, shape index: {}]
  %s3 = sld [smem:[#allocation0]]
  $region41: #{daum1_forward.1} parent=0
    _
  %s5 = ssub.s32 1, %s3
  %s6 = scalar_select 0, %s5, %s3
  loop: start=0, step=1, limit=10
  $region2: #{daum1_forward.1} parent=0 // loop_pre_header
    _
  $region3: #{daum1_forward.1} parent=0 // loop_header
    %s8 = sphi 0, %s12
    %p9 = scmp.ge.s32.totalorder %s8, 10
    %s18 = sphi 0, %s20
    %s21 = sphi 0, %s18
    %s22 = sphi 0, %s21
    %s38 = sphi 0, %s22
    %s42 = sphi 0, %s42
    %s44 = sphi 0, %s42
    %s45 = sphi 0, %s44
    %s59 = sphi 0, %s45
    %s65 = sphi 0, %s67
    %s68 = sphi 0, %s65
    %s69 = sphi 0, %s68
    %s85 = sphi 0, %s69
  $region4: #{daum1_forward.1} parent=0 // loop_header_branch
    %11 = sbr.rel (%p9) target = $region8
  $region5: #{daum1_forward.1} parent=0 // loop_body
    %s13 = ssub.s32 %s8, 1
    %s14 = ssub.s32 %s8, 2
    %s15 = sadd.s32 %s8, 1
    %s16 = ssub.s32 %s8, %s15
    %p17 = scmp.eq.s32.totalorder %s16, 0
    %s19 = sadd.s32 %s18, 1
    %s20 = scalar_select %p17, %s18, %s19
    %p23 = pneg %p17
    %p24 = scmp.eq.s32.totalorder %s8, 7
    %p25 = por %p23, %p24
    %p26 = scmp.ne.s32.totalorder %s18, %s21
    %p27 = scmp.eq.s32.totalorder %s8, 0
    %p28 = por %p26, %p27
    %p29 = scmp.ne.s32.totalorder %s18, %s21
    %p30 = scmp.eq.s32.totalorder %s13, 7
    %p31 = por %p29, %p30
    %p32 = scmp.ne.s32.totalorder %s21, %s22
    %p33 = scmp.eq.s32.totalorder %s13, 0
    %p34 = por %p32, %p33
    %p35 = scmp.ne.s32.totalorder %s21, %s22
    %p36 = scmp.eq.s32.totalorder %s14, 7
    %p37 = por %p35, %p36
    %p39 = scmp.ne.s32.totalorder %s22, %s38
    %p40 = scmp.eq.s32.totalorder %s14, 0
    %p41 = por %p39, %p40
    %s43 = sadd.s32 %s42, 1
    %p46 = scmp.eq.s32.totalorder %s8, 7
    %p47 = scmp.ne.s32.totalorder %s42, %s44
    %p48 = scmp.eq.s32.totalorder %s8, 0
    %p49 = por %p47, %p48
    %p50 = scmp.ne.s32.totalorder %s42, %s44
    %p51 = scmp.eq.s32.totalorder %s13, 7
    %p52 = por %p50, %p51
    %p53 = scmp.ne.s32.totalorder %s44, %s45
    %p54 = scmp.eq.s32.totalorder %s13, 0
    %p55 = por %p53, %p54
    %p56 = scmp.ne.s32.totalorder %s44, %s45
    %p57 = scmp.eq.s32.totalorder %s14, 7
    %p58 = por %p56, %p57
    %p60 = scmp.ne.s32.totalorder %s45, %s59
    %p61 = scmp.eq.s32.totalorder %s14, 0
    %p62 = por %p60, %p61
    %s63 = ssub.s32 %s8, %s15
    %p64 = scmp.eq.s32.totalorder %s63, 0
    %s66 = sadd.s32 %s65, 1
    %s67 = scalar_select %p64, %s65, %s66
    %p70 = pneg %p64
    %p71 = scmp.eq.s32.totalorder %s8, 7
    %p72 = por %p70, %p71
    %p73 = scmp.ne.s32.totalorder %s65, %s68
    %p74 = scmp.eq.s32.totalorder %s8, 0
    %p75 = por %p73, %p74
    %p76 = scmp.ne.s32.totalorder %s65, %s68
    %p77 = scmp.eq.s32.totalorder %s13, 7
    %p78 = por %p76, %p77
    %p79 = scmp.ne.s32.totalorder %s68, %s69
    %p80 = scmp.eq.s32.totalorder %s13, 0
    %p81 = por %p79, %p80
    %p82 = scmp.ne.s32.totalorder %s68, %s69
    %p83 = scmp.eq.s32.totalorder %s14, 7
    %p84 = por %p82, %p83
    %p86 = scmp.ne.s32.totalorder %s69, %s85
    %p87 = scmp.eq.s32.totalorder %s14, 0
    %p88 = por %p86, %p87
    %p89 = scmp.le.s32.totalorder 1, %s8
    %p90 = scmp.lt.s32.totalorder %s8, 9
    %p91 = pnand %p89, %p90
    %p92 = pneg %p91
    // Predicated region
    $region9: #{daum1_forward.1} parent=5 // pred_check
      _
    $region10: #{daum1_forward.1} parent=5 // pred_check_branch
      %94 = sbr.rel (%p91) target = $region12
    $region11: #{daum1_forward.1} parent=5 // pred_region
      %s95 = ssub.s32 %s8, 1
      // Predicated region
      $region13: #{daum1_forward.1} parent=11 // pred_check
        %p96 = pneg %p55
      $region14: #{daum1_forward.1} parent=11 // pred_check_branch
        %98 = sbr.rel (%p96) target = $region16
      $region15: #{daum1_forward.1} parent=11 // pred_region
        _
      $region16: #{daum1_forward.1} parent=11 // pred_fallthru
        _
    $region12: #{daum1_forward.1} parent=5 // pred_fallthru
      _
    %p99 = scmp.lt.s32.totalorder %s8, 8
    // Predicated region
    $region17: #{daum1_forward.1} parent=5 // pred_check
      %p100 = pneg %p99
    $region18: #{daum1_forward.1} parent=5 // pred_check_branch
      %102 = sbr.rel (%p100) target = $region20
    $region19: #{daum1_forward.1} parent=5 // pred_region
      // Predicated region
      $region21: #{daum1_forward.1} parent=19 // pred_check
        %p103 = pneg %p28
      $region22: #{daum1_forward.1} parent=19 // pred_check_branch
        %105 = sbr.rel (%p103) target = $region24
      $region23: #{daum1_forward.1} parent=19 // pred_region
        %p106 = scmp.lt.s32.totalorder %s8, 7
        %s107 = scalar_select %p106, %s8, 7
        %s108 = smul.addr %s107, 2
        %s109 = smul.addr %s108, 8
        %s110 = scalar_lea.vmem %s0, %s109
      $region24: #{daum1_forward.1} parent=19 // pred_fallthru
        _
    $region20: #{daum1_forward.1} parent=5 // pred_fallthru
      _
    %p111 = scmp.le.s32.totalorder 1, %s8
    %p112 = scmp.lt.s32.totalorder %s8, 9
    %p113 = pnand %p111, %p112
    %p114 = pneg %p113
    // Predicated region
    $region25: #{daum1_forward.1} parent=5 // pred_check
      _
    $region26: #{daum1_forward.1} parent=5 // pred_check_branch
      %116 = sbr.rel (%p113) target = $region28
    $region27: #{daum1_forward.1} parent=5 // pred_region
      %s117 = ssub.s32 %s8, 1
      %p118 = scmp.lt.s32.totalorder %s13, 7
      %s119 = scalar_select %p118, %s13, 7
      %s120 = smul.addr %s119, 2
      %s121 = smul.addr %s120, 8
      %s122 = scalar_lea.vmem %s0, %s121
      %p123 = pneg %p34
      %p124 = pneg %p31
      %p125 = pneg %p55
      %p126 = pneg %p52
      %p127 = pneg %p81
      %p128 = pneg %p78
      %p129 = scmp.lt.s32.totalorder %s13, 7
      %s130 = scalar_select %p129, %s13, 7
      %s131 = scalar_lea.vmem %s2, %s130
      %p132 = scmp.lt.s32.totalorder %s13, 7
      %s133 = scalar_select %p132, %s13, 7
      %s134 = smul.addr %s133, 2
      %s135 = smul.addr %s134, 8
      %s136 = scalar_lea.vmem %s0, %s135
      %p137 = scmp.lt.s32.totalorder %s13, 7
      %s138 = scalar_select %p137, %s13, 7
      %s139 = scalar_lea.vmem %s2, %s138
      %v140 = vld [vmem:[%s136] sm:$0xff]
      %v141 = vld [vmem:[%s136 + $0x8] sm:$0xff]
      %v142 = vld [vmem:[%s1] sm:$0xff]
      %v143 = vld [vmem:[%s1 + $0x8] sm:$0x3]
      %v144 = vadd.f32 %v140, %v142
      %v145 = vadd.f32 %v141, %v143
      %v146 = vld [vmem:[%s1] sm:$0x7]
      %v147 = vld [vmem:[%s1 + $0x3] sm:$0x1]
      %v148 = vlaneseq
      %v149 = vshrl.u32 %v148, 7
      %v150 = vsub.s32 0, %v149
      %v151 = vrot.slane %v147, %v150
      %153 = vrot.lane.b32.xlu0 %v146, 120
      %v154 = vpop.permute.xlu0 %153
      %156 = vrot.lane.b32.xlu0 %v151, 120
      %v157 = vpop.permute.xlu0 %156
      %vm159 = vcmask 23552
      %v161 = vsel %vm159, %v144, 0
      %v164 = vsel %vm159, %v145, 0
      %vm166 = vcmask 1042432
      %v167 = vsel %vm166, %v154, 0
      %169 = vmatprep.subr.mxu0 0.0
      %170 = vmatpush1.msra.mxu0 %v167
      %171 = vmatprep.subr.mxu0 0.0
      %172 = vmatpush1.msra.mxu0 0.0
      %173 = vmatprep.subr.mxu0 0.0
      %174 = vmatpush1.msra.mxu0 0.0
      %175 = vmatprep.subr.mxu0 0.0
      %176 = vmatpush1.msra.mxu0 0.0
      %177 = vmatprep.subr.mxu0 0.0
      %178 = vmatpush1.msra.mxu0 0.0
      %179 = vmatprep.subr.mxu0 0.0
      %180 = vmatpush1.msra.mxu0 0.0
      %181 = vmatprep.subr.mxu0 0.0
      %182 = vmatpush1.msra.mxu0 0.0
      %183 = vmatprep.subr.mxu0 0.0
      %184 = vmatpush1.msra.mxu0 0.0
      %185 = vmatprep.subr.mxu0 0.0
      %186 = vmatpush1.msra.mxu0 0.0
      %187 = vmatprep.subr.mxu0 0.0
      %188 = vmatpush1.msra.mxu0 0.0
      %189 = vmatprep.subr.mxu0 0.0
      %190 = vmatpush1.msra.mxu0 0.0
      %191 = vmatprep.subr.mxu0 0.0
      %192 = vmatpush1.msra.mxu0 0.0
      %193 = vmatprep.subr.mxu0 0.0
      %194 = vmatpush1.msra.mxu0 0.0
      %195 = vmatprep.subr.mxu0 0.0
      %196 = vmatpush1.msra.mxu0 0.0
      %197 = vmatprep.subr.mxu0 0.0
      %198 = vmatpush1.msra.mxu0 0.0
      %199 = vmatprep.subr.mxu0 0.0
      %200 = vmatpush1.msra.mxu0 0.0
      %201 = vmatprep.subr.mxu0 0.0
      %202 = vmatpush1.msra.mxu0 0.0
      %203 = vmatprep.subr.mxu0 0.0
      %204 = vmatpush1.msra.mxu0 0.0
      %205 = vmatprep.subr.mxu0 0.0
      %206 = vmatpush1.msra.mxu0 0.0
      %207 = vmatprep.subr.mxu0 0.0
      %208 = vmatpush1.msra.mxu0 0.0
      %209 = vmatprep.subr.mxu0 0.0
      %210 = vmatpush1.msra.mxu0 0.0
      %211 = vmatprep.subr.mxu0 0.0
      %212 = vmatpush1.msra.mxu0 0.0
      %213 = vmatprep.subr.mxu0 0.0
      %214 = vmatpush1.msra.mxu0 0.0
      %215 = vmatprep.subr.mxu0 0.0
      %216 = vmatpush1.msra.mxu0 0.0
      %217 = vmatprep.subr.mxu0 0.0
      %218 = vmatpush1.msra.mxu0 0.0
      %219 = vmatprep.subr.mxu0 0.0
      %220 = vmatpush1.msra.mxu0 0.0
      %221 = vmatprep.subr.mxu0 0.0
      %222 = vmatpush1.msra.mxu0 0.0
      %223 = vmatprep.subr.mxu0 0.0
      %224 = vmatpush1.msra.mxu0 0.0
      %225 = vmatprep.subr.mxu0 0.0
      %226 = vmatpush1.msra.mxu0 0.0
      %227 = vmatprep.subr.mxu0 0.0
      %228 = vmatpush1.msra.mxu0 0.0
      %229 = vmatprep.subr.mxu0 0.0
      %230 = vmatpush1.msra.mxu0 0.0
      %231 = vmatprep.subr.mxu0 0.0
      %232 = vmatpush1.msra.mxu0 0.0
      %233 = vmatprep.mubr.f32.mxu0 0.0
      %234 = vmatmul.mubr.f32.gmra.mrb[0].mxu0 %v161
      %v235 = vpop.f32.mrb[0].mxu0
      %v236 = vadd.f32 %v157, %v235
      %v237 = vpop.f32.mrb[0].mxu0
      %238 = vmatprep.mubr.f32.mxu0 0.0
      %239 = vmatmul.mubr.f32.gmra.mrb[0].mxu0 %v164
      %v240 = vpop.f32.mrb[0].mxu0
      %v241 = vadd.f32 %v157, %v240
      %v242 = vpop.f32.mrb[0].mxu0
      %243 = vdwg.mxu0
      %246 = vrot.lane.b32.xlu0 %v236, 125
      %v247 = vpop.permute.xlu0 %246
      %248 = vrot.lane.b32.xlu0 %v241, 125
      %v249 = vpop.permute.xlu0 %248
      %v250 = vsel %vm159, %v236, 0
      %v252 = vsel %vm159, %v241, 0
      %v254 = vsel %vm159, %v247, 0
      %v256 = vsel %vm159, %v249, 0
      %258 = vmatprep.subr.mxu0 0.0
      %259 = vmatpush1.xpose.msra.mxu0 %v254
      %260 = vmatprep.subr.mxu0 0.0
      %261 = vmatpush1.xpose.msra.mxu0 %v256
      %262 = vmatprep.subr.mxu0 0.0
      %263 = vmatpush1.xpose.msra.mxu0 0.0
      %264 = vmatprep.subr.mxu0 0.0
      %265 = vmatpush1.xpose.msra.mxu0 0.0
      %266 = vmatprep.subr.mxu0 0.0
      %267 = vmatpush1.xpose.msra.mxu0 0.0
      %268 = vmatprep.subr.mxu0 0.0
      %269 = vmatpush1.xpose.msra.mxu0 0.0
      %270 = vmatprep.subr.mxu0 0.0
      %271 = vmatpush1.xpose.msra.mxu0 0.0
      %272 = vmatprep.subr.mxu0 0.0
      %273 = vmatpush1.xpose.msra.mxu0 0.0
      %274 = vmatprep.subr.mxu0 0.0
      %275 = vmatpush1.xpose.msra.mxu0 0.0
      %276 = vmatprep.subr.mxu0 0.0
      %277 = vmatpush1.xpose.msra.mxu0 0.0
      %278 = vmatprep.subr.mxu0 0.0
      %279 = vmatpush1.xpose.msra.mxu0 0.0
      %280 = vmatprep.subr.mxu0 0.0
      %281 = vmatpush1.xpose.msra.mxu0 0.0
      %282 = vmatprep.subr.mxu0 0.0
      %283 = vmatpush1.xpose.msra.mxu0 0.0
      %284 = vmatprep.subr.mxu0 0.0
      %285 = vmatpush1.xpose.msra.mxu0 0.0
      %286 = vmatprep.subr.mxu0 0.0
      %287 = vmatpush1.xpose.msra.mxu0 0.0
      %288 = vmatprep.subr.mxu0 0.0
      %289 = vmatpush1.xpose.msra.mxu0 0.0
      %290 = vmatprep.subr.mxu0 0.0
      %291 = vmatpush1.xpose.msra.mxu0 0.0
      %292 = vmatprep.subr.mxu0 0.0
      %293 = vmatpush1.xpose.msra.mxu0 0.0
      %294 = vmatprep.subr.mxu0 0.0
      %295 = vmatpush1.xpose.msra.mxu0 0.0
      %296 = vmatprep.subr.mxu0 0.0
      %297 = vmatpush1.xpose.msra.mxu0 0.0
      %298 = vmatprep.subr.mxu0 0.0
      %299 = vmatpush1.xpose.msra.mxu0 0.0
      %300 = vmatprep.subr.mxu0 0.0
      %301 = vmatpush1.xpose.msra.mxu0 0.0
      %302 = vmatprep.subr.mxu0 0.0
      %303 = vmatpush1.xpose.msra.mxu0 0.0
      %304 = vmatprep.subr.mxu0 0.0
      %305 = vmatpush1.xpose.msra.mxu0 0.0
      %306 = vmatprep.subr.mxu0 0.0
      %307 = vmatpush1.xpose.msra.mxu0 0.0
      %308 = vmatprep.subr.mxu0 0.0
      %309 = vmatpush1.xpose.msra.mxu0 0.0
      %310 = vmatprep.subr.mxu0 0.0
      %311 = vmatpush1.xpose.msra.mxu0 0.0
      %312 = vmatprep.subr.mxu0 0.0
      %313 = vmatpush1.xpose.msra.mxu0 0.0
      %314 = vmatprep.subr.mxu0 0.0
      %315 = vmatpush1.xpose.msra.mxu0 0.0
      %316 = vmatprep.subr.mxu0 0.0
      %317 = vmatpush1.xpose.msra.mxu0 0.0
      %318 = vmatprep.subr.mxu0 0.0
      %319 = vmatpush1.xpose.msra.mxu0 0.0
      %320 = vmatprep.subr.mxu0 0.0
      %321 = vmatpush1.xpose.msra.mxu0 0.0
      %322 = vmatprep.mubr.f32.mxu0 0.0
      %323 = vmatmul.mubr.f32.gmra.mrb[0].mxu0 %v250
      %v324 = vpop.f32.mrb[0].mxu0
      %v325 = vadd.f32 0.0, %v324
      %v326 = vpop.f32.mrb[0].mxu0
      %327 = vmatprep.mubr.f32.mxu0 0.0
      %328 = vmatmul.mubr.f32.gmra.mrb[0].mxu0 %v252
      %v329 = vpop.f32.mrb[0].mxu0
      %v330 = vadd.f32 0.0, %v329
      %v331 = vpop.f32.mrb[0].mxu0
      %332 = vdwg.mxu0
      %v333 = vmul.f32 %v325, 0.57735026
      %v334 = vmul.f32 %v330, 0.57735026
      %vm335 = vcmask 80896
      %v336 = vsel %vm335, %v333, -inf
      %337 = vmax.xlane.f32.xlu0 %v336
      %v338 = vpop.xlane.xlu0 %337
      %vm339 = vcmask 74752
      %v340 = vsel %vm339, %v334, -inf
      %341 = vmax.xlane.f32.xlu0 %v340
      %v342 = vpop.xlane.xlu0 %341
      %v343 = vsub.f32 %v333, %v338
      %v344 = vsub.f32 %v334, %v342
      %v345 = vmul.f32 %v343, 1.442695
      %v346 = vpow.pop %v345
      %v347 = vmul.f32 %v344, 1.442695
      %v348 = vpow.pop %v347
      %v349 = vsel %vm335, %v346, 0.0
      %350 = vadd.xlane.f32.xlu0 %v349
      %v351 = vpop.xlane.xlu0 %350
      %v352 = vsel %vm339, %v348, 0.0
      %353 = vadd.xlane.f32.xlu0 %v352
      %v354 = vpop.xlane.xlu0 %353
      %v355 = vrcp.pop %v351
      %v356 = vmul.f32 %v346, %v355
      %v357 = vrcp.pop %v354
      %v358 = vmul.f32 %v348, %v357
      %359 = vrot.lane.b32.xlu0 %v236, 122
      %v360 = vpop.permute.xlu0 %359
      %361 = vrot.lane.b32.xlu0 %v241, 122
      %v362 = vpop.permute.xlu0 %361
      %v365 = vsel %vm335, %v356, 0
      %v368 = vsel %vm335, %v358, 0
      %vm370 = vcmask 1041408
      %v371 = vsel %vm370, %v362, 0
      %373 = vmatprep.subr.mxu0 0.0
      %374 = vmatpush1.msra.mxu0 %v360
      %375 = vmatprep.subr.mxu0 0.0
      %376 = vmatpush1.msra.mxu0 %v371
      %377 = vmatprep.subr.mxu0 0.0
      %378 = vmatpush1.msra.mxu0 0.0
      %379 = vmatprep.subr.mxu0 0.0
      %380 = vmatpush1.msra.mxu0 0.0
      %381 = vmatprep.subr.mxu0 0.0
      %382 = vmatpush1.msra.mxu0 0.0
      %383 = vmatprep.subr.mxu0 0.0
      %384 = vmatpush1.msra.mxu0 0.0
      %385 = vmatprep.subr.mxu0 0.0
      %386 = vmatpush1.msra.mxu0 0.0
      %387 = vmatprep.subr.mxu0 0.0
      %388 = vmatpush1.msra.mxu0 0.0
      %389 = vmatprep.subr.mxu0 0.0
      %390 = vmatpush1.msra.mxu0 0.0
      %391 = vmatprep.subr.mxu0 0.0
      %392 = vmatpush1.msra.mxu0 0.0
      %393 = vmatprep.subr.mxu0 0.0
      %394 = vmatpush1.msra.mxu0 0.0
      %395 = vmatprep.subr.mxu0 0.0
      %396 = vmatpush1.msra.mxu0 0.0
      %397 = vmatprep.subr.mxu0 0.0
      %398 = vmatpush1.msra.mxu0 0.0
      %399 = vmatprep.subr.mxu0 0.0
      %400 = vmatpush1.msra.mxu0 0.0
      %401 = vmatprep.subr.mxu0 0.0
      %402 = vmatpush1.msra.mxu0 0.0
      %403 = vmatprep.subr.mxu0 0.0
      %404 = vmatpush1.msra.mxu0 0.0
      %405 = vmatprep.subr.mxu0 0.0
      %406 = vmatpush1.msra.mxu0 0.0
      %407 = vmatprep.subr.mxu0 0.0
      %408 = vmatpush1.msra.mxu0 0.0
      %409 = vmatprep.subr.mxu0 0.0
      %410 = vmatpush1.msra.mxu0 0.0
      %411 = vmatprep.subr.mxu0 0.0
      %412 = vmatpush1.msra.mxu0 0.0
      %413 = vmatprep.subr.mxu0 0.0
      %414 = vmatpush1.msra.mxu0 0.0
      %415 = vmatprep.subr.mxu0 0.0
      %416 = vmatpush1.msra.mxu0 0.0
      %417 = vmatprep.subr.mxu0 0.0
      %418 = vmatpush1.msra.mxu0 0.0
      %419 = vmatprep.subr.mxu0 0.0
      %420 = vmatpush1.msra.mxu0 0.0
      %421 = vmatprep.subr.mxu0 0.0
      %422 = vmatpush1.msra.mxu0 0.0
      %423 = vmatprep.subr.mxu0 0.0
      %424 = vmatpush1.msra.mxu0 0.0
      %425 = vmatprep.subr.mxu0 0.0
      %426 = vmatpush1.msra.mxu0 0.0
      %427 = vmatprep.subr.mxu0 0.0
      %428 = vmatpush1.msra.mxu0 0.0
      %429 = vmatprep.subr.mxu0 0.0
      %430 = vmatpush1.msra.mxu0 0.0
      %431 = vmatprep.subr.mxu0 0.0
      %432 = vmatpush1.msra.mxu0 0.0
      %433 = vmatprep.subr.mxu0 0.0
      %434 = vmatpush1.msra.mxu0 0.0
      %435 = vmatprep.subr.mxu0 0.0
      %436 = vmatpush1.msra.mxu0 0.0
      %437 = vmatprep.mubr.f32.mxu0 0.0
      %438 = vmatmul.mubr.f32.gmra.mrb[0].mxu0 %v365
      %v439 = vpop.f32.mrb[0].mxu0
      %v440 = vadd.f32 0.0, %v439
      %v441 = vpop.f32.mrb[0].mxu0
      %442 = vmatprep.mubr.f32.mxu0 0.0
      %443 = vmatmul.mubr.f32.gmra.mrb[0].mxu0 %v368
      %v444 = vpop.f32.mrb[0].mxu0
      %v445 = vadd.f32 0.0, %v444
      %v446 = vpop.f32.mrb[0].mxu0
      %447 = vdwg.mxu0
      %v448 = vld [vmem:[%s1 + $0xa] sm:$0x7]
      %v449 = vld [vmem:[%s1 + $0xd] sm:$0x1]
      %v450 = vlaneseq
      %v451 = vshrl.u32 %v450, 7
      %v452 = vsub.s32 0, %v451
      %v453 = vrot.slane %v449, %v452
      %v455 = vsel %vm159, %v440, 0
      %v458 = vsel %vm159, %v445, 0
      %v461 = vsel %vm166, %v448, 0
      %463 = vmatprep.subr.mxu0 0.0
      %464 = vmatpush1.msra.mxu0 %v461
      %465 = vmatprep.subr.mxu0 0.0
      %466 = vmatpush1.msra.mxu0 0.0
      %467 = vmatprep.subr.mxu0 0.0
      %468 = vmatpush1.msra.mxu0 0.0
      %469 = vmatprep.subr.mxu0 0.0
      %470 = vmatpush1.msra.mxu0 0.0
      %471 = vmatprep.subr.mxu0 0.0
      %472 = vmatpush1.msra.mxu0 0.0
      %473 = vmatprep.subr.mxu0 0.0
      %474 = vmatpush1.msra.mxu0 0.0
      %475 = vmatprep.subr.mxu0 0.0
      %476 = vmatpush1.msra.mxu0 0.0
      %477 = vmatprep.subr.mxu0 0.0
      %478 = vmatpush1.msra.mxu0 0.0
      %479 = vmatprep.subr.mxu0 0.0
      %480 = vmatpush1.msra.mxu0 0.0
      %481 = vmatprep.subr.mxu0 0.0
      %482 = vmatpush1.msra.mxu0 0.0
      %483 = vmatprep.subr.mxu0 0.0
      %484 = vmatpush1.msra.mxu0 0.0
      %485 = vmatprep.subr.mxu0 0.0
      %486 = vmatpush1.msra.mxu0 0.0
      %487 = vmatprep.subr.mxu0 0.0
      %488 = vmatpush1.msra.mxu0 0.0
      %489 = vmatprep.subr.mxu0 0.0
      %490 = vmatpush1.msra.mxu0 0.0
      %491 = vmatprep.subr.mxu0 0.0
      %492 = vmatpush1.msra.mxu0 0.0
      %493 = vmatprep.subr.mxu0 0.0
      %494 = vmatpush1.msra.mxu0 0.0
      %495 = vmatprep.subr.mxu0 0.0
      %496 = vmatpush1.msra.mxu0 0.0
      %497 = vmatprep.subr.mxu0 0.0
      %498 = vmatpush1.msra.mxu0 0.0
      %499 = vmatprep.subr.mxu0 0.0
      %500 = vmatpush1.msra.mxu0 0.0
      %501 = vmatprep.subr.mxu0 0.0
      %502 = vmatpush1.msra.mxu0 0.0
      %503 = vmatprep.subr.mxu0 0.0
      %504 = vmatpush1.msra.mxu0 0.0
      %505 = vmatprep.subr.mxu0 0.0
      %506 = vmatpush1.msra.mxu0 0.0
      %507 = vmatprep.subr.mxu0 0.0
      %508 = vmatpush1.msra.mxu0 0.0
      %509 = vmatprep.subr.mxu0 0.0
      %510 = vmatpush1.msra.mxu0 0.0
      %511 = vmatprep.subr.mxu0 0.0
      %512 = vmatpush1.msra.mxu0 0.0
      %513 = vmatprep.subr.mxu0 0.0
      %514 = vmatpush1.msra.mxu0 0.0
      %515 = vmatprep.subr.mxu0 0.0
      %516 = vmatpush1.msra.mxu0 0.0
      %517 = vmatprep.subr.mxu0 0.0
      %518 = vmatpush1.msra.mxu0 0.0
      %519 = vmatprep.subr.mxu0 0.0
      %520 = vmatpush1.msra.mxu0 0.0
      %521 = vmatprep.subr.mxu0 0.0
      %522 = vmatpush1.msra.mxu0 0.0
      %523 = vmatprep.subr.mxu0 0.0
      %524 = vmatpush1.msra.mxu0 0.0
      %525 = vmatprep.subr.mxu0 0.0
      %526 = vmatpush1.msra.mxu0 0.0
      %527 = vmatprep.mubr.f32.mxu0 0.0
      %528 = vmatmul.mubr.f32.gmra.mrb[0].mxu0 %v455
      %v529 = vpop.f32.mrb[0].mxu0
      %v530 = vadd.f32 %v453, %v529
      %v531 = vpop.f32.mrb[0].mxu0
      %532 = vmatprep.mubr.f32.mxu0 0.0
      %533 = vmatmul.mubr.f32.gmra.mrb[0].mxu0 %v458
      %v534 = vpop.f32.mrb[0].mxu0
      %v535 = vadd.f32 %v453, %v534
      %v536 = vpop.f32.mrb[0].mxu0
      %537 = vdwg.mxu0
      %v538 = vadd.f32 %v144, %v530
      %v539 = vadd.f32 %v145, %v535
      %v540 = vsel %vm159, %v538, 0.0
      %541 = vadd.xlane.f32.xlu0 %v540
      %v542 = vpop.xlane.xlu0 %541
      %vm543 = vcmask 17408
      %v544 = vsel %vm543, %v539, 0.0
      %545 = vadd.xlane.f32.xlu0 %v544
      %v546 = vpop.xlane.xlu0 %545
      %v547 = vrcp.pop 3.0
      %v548 = vmul.f32 %v542, %v547
      %v549 = vmul.f32 %v546, %v547
      %v550 = vsub.f32 %v538, %v548
      %v551 = vsub.f32 %v539, %v549
      %v552 = vmul.f32 %v550, %v550
      %v553 = vmul.f32 %v551, %v551
      %v554 = vsel %vm159, %v552, 0.0
      %555 = vadd.xlane.f32.xlu0 %v554
      %v556 = vpop.xlane.xlu0 %555
      %v557 = vsel %vm543, %v553, 0.0
      %558 = vadd.xlane.f32.xlu0 %v557
      %v559 = vpop.xlane.xlu0 %558
      %v560 = vmul.f32 %v556, %v547
      %v561 = vmul.f32 %v559, %v547
      %v562 = vld [vmem:[%s1 + $0xe] sm:$0x1]
      %v563 = vadd.f32 %v560, 1e-05
      %v564 = vadd.f32 %v561, 1e-05
      %v565 = vrsqrt.pop %v563
      %v566 = vrsqrt.pop %v564
      %v567 = vmul.f32 %v550, %v565
      %v568 = vmul.f32 %v551, %v566
      %v569 = vlaneseq
      %v570 = vshrl.u32 %v569, 7
      %v571 = vsub.s32 0, %v570
      %v572 = vrot.slane %v562, %v571
      %v573 = vmul.f32 %v572, %v567
      %v574 = vmul.f32 %v572, %v568
      %v575 = vld [vmem:[%s1 + $0xf] sm:$0x1]
      %v576 = vlaneseq
      %v577 = vshrl.u32 %v576, 7
      %v578 = vsub.s32 0, %v577
      %v579 = vrot.slane %v575, %v578
      %v580 = vadd.f32 %v573, %v579
      %v581 = vadd.f32 %v574, %v579
      %582 = vrot.lane.b32.xlu0 %v146, 108
      %v583 = vpop.permute.xlu0 %582
      %584 = vrot.lane.b32.xlu0 %v151, 108
      %v585 = vpop.permute.xlu0 %584
      %v588 = vsel %vm159, %v580, 0
      %v591 = vsel %vm159, %v581, 0
      %v593 = vsel %vm166, %v583, 0
      %595 = vmatprep.subr.mxu0 0.0
      %596 = vmatpush1.msra.mxu0 %v593
      %597 = vmatprep.subr.mxu0 0.0
      %598 = vmatpush1.msra.mxu0 0.0
      %599 = vmatprep.subr.mxu0 0.0
      %600 = vmatpush1.msra.mxu0 0.0
      %601 = vmatprep.subr.mxu0 0.0
      %602 = vmatpush1.msra.mxu0 0.0
      %603 = vmatprep.subr.mxu0 0.0
      %604 = vmatpush1.msra.mxu0 0.0
      %605 = vmatprep.subr.mxu0 0.0
      %606 = vmatpush1.msra.mxu0 0.0
      %607 = vmatprep.subr.mxu0 0.0
      %608 = vmatpush1.msra.mxu0 0.0
      %609 = vmatprep.subr.mxu0 0.0
      %610 = vmatpush1.msra.mxu0 0.0
      %611 = vmatprep.subr.mxu0 0.0
      %612 = vmatpush1.msra.mxu0 0.0
      %613 = vmatprep.subr.mxu0 0.0
      %614 = vmatpush1.msra.mxu0 0.0
      %615 = vmatprep.subr.mxu0 0.0
      %616 = vmatpush1.msra.mxu0 0.0
      %617 = vmatprep.subr.mxu0 0.0
      %618 = vmatpush1.msra.mxu0 0.0
      %619 = vmatprep.subr.mxu0 0.0
      %620 = vmatpush1.msra.mxu0 0.0
      %621 = vmatprep.subr.mxu0 0.0
      %622 = vmatpush1.msra.mxu0 0.0
      %623 = vmatprep.subr.mxu0 0.0
      %624 = vmatpush1.msra.mxu0 0.0
      %625 = vmatprep.subr.mxu0 0.0
      %626 = vmatpush1.msra.mxu0 0.0
      %627 = vmatprep.subr.mxu0 0.0
      %628 = vmatpush1.msra.mxu0 0.0
      %629 = vmatprep.subr.mxu0 0.0
      %630 = vmatpush1.msra.mxu0 0.0
      %631 = vmatprep.subr.mxu0 0.0
      %632 = vmatpush1.msra.mxu0 0.0
      %633 = vmatprep.subr.mxu0 0.0
      %634 = vmatpush1.msra.mxu0 0.0
      %635 = vmatprep.subr.mxu0 0.0
      %636 = vmatpush1.msra.mxu0 0.0
      %637 = vmatprep.subr.mxu0 0.0
      %638 = vmatpush1.msra.mxu0 0.0
      %639 = vmatprep.subr.mxu0 0.0
      %640 = vmatpush1.msra.mxu0 0.0
      %641 = vmatprep.subr.mxu0 0.0
      %642 = vmatpush1.msra.mxu0 0.0
      %643 = vmatprep.subr.mxu0 0.0
      %644 = vmatpush1.msra.mxu0 0.0
      %645 = vmatprep.subr.mxu0 0.0
      %646 = vmatpush1.msra.mxu0 0.0
      %647 = vmatprep.subr.mxu0 0.0
      %648 = vmatpush1.msra.mxu0 0.0
      %649 = vmatprep.subr.mxu0 0.0
      %650 = vmatpush1.msra.mxu0 0.0
      %651 = vmatprep.subr.mxu0 0.0
      %652 = vmatpush1.msra.mxu0 0.0
      %653 = vmatprep.subr.mxu0 0.0
      %654 = vmatpush1.msra.mxu0 0.0
      %655 = vmatprep.subr.mxu0 0.0
      %656 = vmatpush1.msra.mxu0 0.0
      %657 = vmatprep.subr.mxu0 0.0
      %658 = vmatpush1.msra.mxu0 0.0
      %659 = vmatprep.mubr.f32.mxu0 0.0
      %660 = vmatmul.mubr.f32.gmra.mrb[0].mxu0 %v588
      %v661 = vpop.f32.mrb[0].mxu0
      %v662 = vadd.f32 %v585, %v661
      %v663 = vpop.f32.mrb[0].mxu0
      %664 = vmatprep.mubr.f32.mxu0 0.0
      %665 = vmatmul.mubr.f32.gmra.mrb[0].mxu0 %v591
      %v666 = vpop.f32.mrb[0].mxu0
      %v667 = vadd.f32 %v585, %v666
      %v668 = vpop.f32.mrb[0].mxu0
      %669 = vdwg.mxu0
      %v670 = vmax.f32 %v662, 0.0
      %v671 = vmax.f32 %v667, 0.0
      %v672 = vld [vmem:[%s1] sm:$0xff]
      %v673 = vld [vmem:[%s1 + $0x8] sm:$0xff]
      %v674 = vld [vmem:[%s1 + $0x4] sm:$0x1]
      %v675 = vlaneseq
      %v676 = vshrl.u32 %v675, 7
      %v677 = vsub.s32 0, %v676
      %v678 = vrot.slane %v674, %v677
      %681 = vrot.lane.b32.xlu0 %v672, 125
      %v682 = vpop.permute.xlu0 %681
      %683 = vrot.lane.b32.xlu0 %v673, 125
      %v684 = vpop.permute.xlu0 %683
      %688 = vrot.lane.b32.xlu0 %v678, 120
      %v689 = vpop.permute.xlu0 %688
      %vm691 = vcmask 130048
      %v693 = vsel %vm691, %v670, 0
      %v696 = vsel %vm691, %v671, 0
      %698 = vmatprep.subr.mxu0 0.0
      %699 = vmatpush1.msra.mxu0 %v682
      %700 = vmatprep.subr.mxu0 0.0
      %701 = vmatpush1.msra.mxu0 %v684
      %702 = vmatprep.subr.mxu0 0.0
      %703 = vmatpush1.msra.mxu0 0.0
      %704 = vmatprep.subr.mxu0 0.0
      %705 = vmatpush1.msra.mxu0 0.0
      %706 = vmatprep.subr.mxu0 0.0
      %707 = vmatpush1.msra.mxu0 0.0
      %708 = vmatprep.subr.mxu0 0.0
      %709 = vmatpush1.msra.mxu0 0.0
      %710 = vmatprep.subr.mxu0 0.0
      %711 = vmatpush1.msra.mxu0 0.0
      %712 = vmatprep.subr.mxu0 0.0
      %713 = vmatpush1.msra.mxu0 0.0
      %714 = vmatprep.subr.mxu0 0.0
      %715 = vmatpush1.msra.mxu0 0.0
      %716 = vmatprep.subr.mxu0 0.0
      %717 = vmatpush1.msra.mxu0 0.0
      %718 = vmatprep.subr.mxu0 0.0
      %719 = vmatpush1.msra.mxu0 0.0
      %720 = vmatprep.subr.mxu0 0.0
      %721 = vmatpush1.msra.mxu0 0.0
      %722 = vmatprep.subr.mxu0 0.0
      %723 = vmatpush1.msra.mxu0 0.0
      %724 = vmatprep.subr.mxu0 0.0
      %725 = vmatpush1.msra.mxu0 0.0
      %726 = vmatprep.subr.mxu0 0.0
      %727 = vmatpush1.msra.mxu0 0.0
      %728 = vmatprep.subr.mxu0 0.0
      %729 = vmatpush1.msra.mxu0 0.0
      %730 = vmatprep.subr.mxu0 0.0
      %731 = vmatpush1.msra.mxu0 0.0
      %732 = vmatprep.subr.mxu0 0.0
      %733 = vmatpush1.msra.mxu0 0.0
      %734 = vmatprep.subr.mxu0 0.0
      %735 = vmatpush1.msra.mxu0 0.0
      %736 = vmatprep.subr.mxu0 0.0
      %737 = vmatpush1.msra.mxu0 0.0
      %738 = vmatprep.subr.mxu0 0.0
      %739 = vmatpush1.msra.mxu0 0.0
      %740 = vmatprep.subr.mxu0 0.0
      %741 = vmatpush1.msra.mxu0 0.0
      %742 = vmatprep.subr.mxu0 0.0
      %743 = vmatpush1.msra.mxu0 0.0
      %744 = vmatprep.subr.mxu0 0.0
      %745 = vmatpush1.msra.mxu0 0.0
      %746 = vmatprep.subr.mxu0 0.0
      %747 = vmatpush1.msra.mxu0 0.0
      %748 = vmatprep.subr.mxu0 0.0
      %749 = vmatpush1.msra.mxu0 0.0
      %750 = vmatprep.subr.mxu0 0.0
      %751 = vmatpush1.msra.mxu0 0.0
      %752 = vmatprep.subr.mxu0 0.0
      %753 = vmatpush1.msra.mxu0 0.0
      %754 = vmatprep.subr.mxu0 0.0
      %755 = vmatpush1.msra.mxu0 0.0
      %756 = vmatprep.subr.mxu0 0.0
      %757 = vmatpush1.msra.mxu0 0.0
      %758 = vmatprep.subr.mxu0 0.0
      %759 = vmatpush1.msra.mxu0 0.0
      %760 = vmatprep.subr.mxu0 0.0
      %761 = vmatpush1.msra.mxu0 0.0
      %762 = vmatprep.mubr.f32.mxu0 0.0
      %763 = vmatmul.mubr.f32.gmra.mrb[0].mxu0 %v693
      %v764 = vpop.f32.mrb[0].mxu0
      %v765 = vadd.f32 %v689, %v764
      %v766 = vpop.f32.mrb[0].mxu0
      %767 = vmatprep.mubr.f32.mxu0 0.0
      %768 = vmatmul.mubr.f32.gmra.mrb[0].mxu0 %v696
      %v769 = vpop.f32.mrb[0].mxu0
      %v770 = vadd.f32 %v689, %v769
      %v771 = vpop.f32.mrb[0].mxu0
      %772 = vdwg.mxu0
      %v773 = vadd.f32 %v765, %v580
      %v774 = vadd.f32 %v770, %v581
      %v775 = vsel %vm159, %v773, 0.0
      %776 = vadd.xlane.f32.xlu0 %v775
      %v777 = vpop.xlane.xlu0 %776
      %v778 = vsel %vm543, %v774, 0.0
      %779 = vadd.xlane.f32.xlu0 %v778
      %v780 = vpop.xlane.xlu0 %779
      %v781 = vmul.f32 %v777, %v547
      %v782 = vmul.f32 %v780, %v547
      %v783 = vsub.f32 %v773, %v781
      %v784 = vsub.f32 %v774, %v782
      %v785 = vmul.f32 %v783, %v783
      %v786 = vmul.f32 %v784, %v784
      %v787 = vsel %vm159, %v785, 0.0
      %788 = vadd.xlane.f32.xlu0 %v787
      %v789 = vpop.xlane.xlu0 %788
      %v790 = vsel %vm543, %v786, 0.0
      %791 = vadd.xlane.f32.xlu0 %v790
      %v792 = vpop.xlane.xlu0 %791
      %v793 = vmul.f32 %v789, %v547
      %v794 = vmul.f32 %v792, %v547
      %v795 = vadd.f32 %v793, 1e-05
      %v796 = vadd.f32 %v794, 1e-05
      %v797 = vrsqrt.pop %v795
      %v798 = vrsqrt.pop %v796
      %v799 = vmul.f32 %v783, %v797
      %v800 = vmul.f32 %v784, %v798
      %803 = vrot.lane.b32.xlu0 %v799, 11
      %v804 = vpop.permute.xlu0 %803
      %805 = vrot.lane.b32.xlu0 %v800, 11
      %v806 = vpop.permute.xlu0 %805
      %v809 = vmul.f32 %v678, %v804
      %v810 = vmul.f32 %v678, %v806
      %811 = vrot.lane.b32.xlu0 %v678, 125
      %v812 = vpop.permute.xlu0 %811
      %v814 = vadd.f32 %v809, %v812
      %v815 = vadd.f32 %v810, %v812
      %818 = vrot.lane.b32.xlu0 %v814, 117
      %v819 = vpop.permute.xlu0 %818
      %820 = vrot.lane.b32.xlu0 %v815, 117
      %v821 = vpop.permute.xlu0 %820
      %822 = vrot.lane.b32.xlu0 %v448, 92
      %v823 = vpop.permute.xlu0 %822
      %v824 = vsel %vm159, %v819, 0
      %v826 = vsel %vm159, %v821, 0
      %v828 = vsel %vm166, %v823, 0
      %830 = vmatprep.subr.mxu0 0.0
      %831 = vmatpush1.msra.mxu0 %v828
      %832 = vmatprep.subr.mxu0 0.0
      %833 = vmatpush1.msra.mxu0 0.0
      %834 = vmatprep.subr.mxu0 0.0
      %835 = vmatpush1.msra.mxu0 0.0
      %836 = vmatprep.subr.mxu0 0.0
      %837 = vmatpush1.msra.mxu0 0.0
      %838 = vmatprep.subr.mxu0 0.0
      %839 = vmatpush1.msra.mxu0 0.0
      %840 = vmatprep.subr.mxu0 0.0
      %841 = vmatpush1.msra.mxu0 0.0
      %842 = vmatprep.subr.mxu0 0.0
      %843 = vmatpush1.msra.mxu0 0.0
      %844 = vmatprep.subr.mxu0 0.0
      %845 = vmatpush1.msra.mxu0 0.0
      %846 = vmatprep.subr.mxu0 0.0
      %847 = vmatpush1.msra.mxu0 0.0
      %848 = vmatprep.subr.mxu0 0.0
      %849 = vmatpush1.msra.mxu0 0.0
      %850 = vmatprep.subr.mxu0 0.0
      %851 = vmatpush1.msra.mxu0 0.0
      %852 = vmatprep.subr.mxu0 0.0
      %853 = vmatpush1.msra.mxu0 0.0
      %854 = vmatprep.subr.mxu0 0.0
      %855 = vmatpush1.msra.mxu0 0.0
      %856 = vmatprep.subr.mxu0 0.0
      %857 = vmatpush1.msra.mxu0 0.0
      %858 = vmatprep.subr.mxu0 0.0
      %859 = vmatpush1.msra.mxu0 0.0
      %860 = vmatprep.subr.mxu0 0.0
      %861 = vmatpush1.msra.mxu0 0.0
      %862 = vmatprep.subr.mxu0 0.0
      %863 = vmatpush1.msra.mxu0 0.0
      %864 = vmatprep.subr.mxu0 0.0
      %865 = vmatpush1.msra.mxu0 0.0
      %866 = vmatprep.subr.mxu0 0.0
      %867 = vmatpush1.msra.mxu0 0.0
      %868 = vmatprep.subr.mxu0 0.0
      %869 = vmatpush1.msra.mxu0 0.0
      %870 = vmatprep.subr.mxu0 0.0
      %871 = vmatpush1.msra.mxu0 0.0
      %872 = vmatprep.subr.mxu0 0.0
      %873 = vmatpush1.msra.mxu0 0.0
      %874 = vmatprep.subr.mxu0 0.0
      %875 = vmatpush1.msra.mxu0 0.0
      %876 = vmatprep.subr.mxu0 0.0
      %877 = vmatpush1.msra.mxu0 0.0
      %878 = vmatprep.subr.mxu0 0.0
      %879 = vmatpush1.msra.mxu0 0.0
      %880 = vmatprep.subr.mxu0 0.0
      %881 = vmatpush1.msra.mxu0 0.0
      %882 = vmatprep.subr.mxu0 0.0
      %883 = vmatpush1.msra.mxu0 0.0
      %884 = vmatprep.subr.mxu0 0.0
      %885 = vmatpush1.msra.mxu0 0.0
      %886 = vmatprep.subr.mxu0 0.0
      %887 = vmatpush1.msra.mxu0 0.0
      %888 = vmatprep.subr.mxu0 0.0
      %889 = vmatpush1.msra.mxu0 0.0
      %890 = vmatprep.subr.mxu0 0.0
      %891 = vmatpush1.msra.mxu0 0.0
      %892 = vmatprep.subr.mxu0 0.0
      %893 = vmatpush1.msra.mxu0 0.0
      %894 = vmatprep.mubr.f32.mxu0 0.0
      %895 = vmatmul.mubr.f32.gmra.mrb[0].mxu0 %v824
      %v896 = vpop.f32.mrb[0].mxu0
      %v897 = vadd.f32 0.0, %v896
      %v898 = vpop.f32.mrb[0].mxu0
      %899 = vmatprep.mubr.f32.mxu0 0.0
      %900 = vmatmul.mubr.f32.gmra.mrb[0].mxu0 %v826
      %v901 = vpop.f32.mrb[0].mxu0
      %v902 = vadd.f32 0.0, %v901
      %v903 = vpop.f32.mrb[0].mxu0
      %904 = vdwg.mxu0
      %907 = vrot.lane.b32.xlu0 %v142, 92
      %v908 = vpop.permute.xlu0 %907
      %909 = vrot.lane.b32.xlu0 %v143, 92
      %v910 = vpop.permute.xlu0 %909
      %v913 = vmul.f32 %v897, %v908
      %v914 = vmul.f32 %v902, %v910
      %vm915 = vcmask 392192
      %v916 = vsel %vm915, %v913, 0.0
      %vm917 = vcmask 386048
      %v918 = vsel %vm917, %v914, 0.0
      %v919 = vadd.f32 %v916, %v918
      %v920 = vrot.slane %v919, 4
      %v921 = vadd.f32 %v919, %v920
      %v922 = vrot.slane %v921, 2
      %v923 = vadd.f32 %v921, %v922
      %v924 = vrot.slane %v923, 1
      %v925 = vadd.f32 %v923, %v924
      %v926 = vld [vmem:[%s1 + $0x4] sm:$0x3]
      %928 = vset.pattern.permute.xlu0 0
      %929 = vperm.xlu0 %928, %v141
      %v930 = vpop.permute.xlu0 %929
      %v933 = vrot.slane %v926, 6
      %934 = vrot.lane.b32.xlu0 %v933, 108
      %v935 = vpop.permute.xlu0 %934
      %v937 = vmul.f32 %v930, %v935
      %v939 = vrot.slane %v937, 2
      %vm941 = vcmask 123904
      %v942 = vsel %vm941, %v939, 0.0
      %v943 = vrot.slane %v942, 4
      %v944 = vadd.f32 %v942, %v943
      %v945 = vrot.slane %v944, 2
      %v946 = vadd.f32 %v944, %v945
      %v947 = vrot.slane %v946, 1
      %v948 = vadd.f32 %v946, %v947
      %950 = vrot.lane.b32.xlu0 %v925, 112
      %v951 = vpop.permute.xlu0 %950
      %v953 = vadd.f32 %v925, %v951
      %954 = vrot.lane.b32.xlu0 %v925, 96
      %v955 = vpop.permute.xlu0 %954
      %v957 = vadd.f32 %v953, %v955
      %v958 = vadd.f32 %v957, %v948
      %v959 = vld [vmem:[%s1 + $0x6] sm:$0x1]
      %961 = vrot.lane.b32.xlu0 %v959, 108
      %v962 = vpop.permute.xlu0 %961
      %v964 = vadd.f32 %v958, %v962
      %v965 = vmax.f32 %v964, 0.0
      %v966 = vld [vmem:[%s1 + $0x7] sm:$0x1]
      %967 = vrot.lane.b32.xlu0 %v672, 44
      %v968 = vpop.permute.xlu0 %967
      %969 = vrot.lane.b32.xlu0 %v673, 44
      %v970 = vpop.permute.xlu0 %969
      %974 = vrot.lane.b32.xlu0 %v966, 108
      %v975 = vpop.permute.xlu0 %974
      %v978 = vsel %vm691, %v965, 0
      %980 = vmatprep.subr.mxu0 0.0
      %981 = vmatpush1.msra.mxu0 %v968
      %982 = vmatprep.subr.mxu0 0.0
      %983 = vmatpush1.msra.mxu0 %v970
      %984 = vmatprep.subr.mxu0 0.0
      %985 = vmatpush1.msra.mxu0 0.0
      %986 = vmatprep.subr.mxu0 0.0
      %987 = vmatpush1.msra.mxu0 0.0
      %988 = vmatprep.subr.mxu0 0.0
      %989 = vmatpush1.msra.mxu0 0.0
      %990 = vmatprep.subr.mxu0 0.0
      %991 = vmatpush1.msra.mxu0 0.0
      %992 = vmatprep.subr.mxu0 0.0
      %993 = vmatpush1.msra.mxu0 0.0
      %994 = vmatprep.subr.mxu0 0.0
      %995 = vmatpush1.msra.mxu0 0.0
      %996 = vmatprep.subr.mxu0 0.0
      %997 = vmatpush1.msra.mxu0 0.0
      %998 = vmatprep.subr.mxu0 0.0
      %999 = vmatpush1.msra.mxu0 0.0
      %1000 = vmatprep.subr.mxu0 0.0
      %1001 = vmatpush1.msra.mxu0 0.0
      %1002 = vmatprep.subr.mxu0 0.0
      %1003 = vmatpush1.msra.mxu0 0.0
      %1004 = vmatprep.subr.mxu0 0.0
      %1005 = vmatpush1.msra.mxu0 0.0
      %1006 = vmatprep.subr.mxu0 0.0
      %1007 = vmatpush1.msra.mxu0 0.0
      %1008 = vmatprep.subr.mxu0 0.0
      %1009 = vmatpush1.msra.mxu0 0.0
      %1010 = vmatprep.subr.mxu0 0.0
      %1011 = vmatpush1.msra.mxu0 0.0
      %1012 = vmatprep.subr.mxu0 0.0
      %1013 = vmatpush1.msra.mxu0 0.0
      %1014 = vmatprep.subr.mxu0 0.0
      %1015 = vmatpush1.msra.mxu0 0.0
      %1016 = vmatprep.subr.mxu0 0.0
      %1017 = vmatpush1.msra.mxu0 0.0
      %1018 = vmatprep.subr.mxu0 0.0
      %1019 = vmatpush1.msra.mxu0 0.0
      %1020 = vmatprep.subr.mxu0 0.0
      %1021 = vmatpush1.msra.mxu0 0.0
      %1022 = vmatprep.subr.mxu0 0.0
      %1023 = vmatpush1.msra.mxu0 0.0
      %1024 = vmatprep.subr.mxu0 0.0
      %1025 = vmatpush1.msra.mxu0 0.0
      %1026 = vmatprep.subr.mxu0 0.0
      %1027 = vmatpush1.msra.mxu0 0.0
      %1028 = vmatprep.subr.mxu0 0.0
      %1029 = vmatpush1.msra.mxu0 0.0
      %1030 = vmatprep.subr.mxu0 0.0
      %1031 = vmatpush1.msra.mxu0 0.0
      %1032 = vmatprep.subr.mxu0 0.0
      %1033 = vmatpush1.msra.mxu0 0.0
      %1034 = vmatprep.subr.mxu0 0.0
      %1035 = vmatpush1.msra.mxu0 0.0
      %1036 = vmatprep.subr.mxu0 0.0
      %1037 = vmatpush1.msra.mxu0 0.0
      %1038 = vmatprep.subr.mxu0 0.0
      %1039 = vmatpush1.msra.mxu0 0.0
      %1040 = vmatprep.subr.mxu0 0.0
      %1041 = vmatpush1.msra.mxu0 0.0
      %1042 = vmatprep.subr.mxu0 0.0
      %1043 = vmatpush1.msra.mxu0 0.0
      %1044 = vmatprep.mubr.f32.mxu0 0.0
      %1045 = vmatmul.mubr.f32.gmra.mrb[0].mxu0 %v978
      %v1046 = vpop.f32.mrb[0].mxu0
      %v1047 = vadd.f32 %v975, %v1046
      %v1048 = vpop.f32.mrb[0].mxu0
      %1049 = vdwg.mxu0
      %v1050 = vmax.f32 %v1047, 0.0
      %v1051 = vld [vmem:[%s1 + $0x5] sm:$0x1]
      %1052 = vrot.lane.b32.xlu0 %v673, 120
      %v1053 = vpop.permute.xlu0 %1052
      %1056 = vrot.lane.b32.xlu0 %v1051, 120
      %v1057 = vpop.permute.xlu0 %1056
      %vm1059 = vcmask 64512
      %v1061 = vsel %vm1059, %v1050, 0
      %1063 = vmatprep.subr.mxu0 0.0
      %1064 = vmatpush1.msra.mxu0 %v1053
      %1065 = vmatprep.subr.mxu0 0.0
      %1066 = vmatpush1.msra.mxu0 0.0
      %1067 = vmatprep.subr.mxu0 0.0
      %1068 = vmatpush1.msra.mxu0 0.0
      %1069 = vmatprep.subr.mxu0 0.0
      %1070 = vmatpush1.msra.mxu0 0.0
      %1071 = vmatprep.subr.mxu0 0.0
      %1072 = vmatpush1.msra.mxu0 0.0
      %1073 = vmatprep.subr.mxu0 0.0
      %1074 = vmatpush1.msra.mxu0 0.0
      %1075 = vmatprep.subr.mxu0 0.0
      %1076 = vmatpush1.msra.mxu0 0.0
      %1077 = vmatprep.subr.mxu0 0.0
      %1078 = vmatpush1.msra.mxu0 0.0
      %1079 = vmatprep.subr.mxu0 0.0
      %1080 = vmatpush1.msra.mxu0 0.0
      %1081 = vmatprep.subr.mxu0 0.0
      %1082 = vmatpush1.msra.mxu0 0.0
      %1083 = vmatprep.subr.mxu0 0.0
      %1084 = vmatpush1.msra.mxu0 0.0
      %1085 = vmatprep.subr.mxu0 0.0
      %1086 = vmatpush1.msra.mxu0 0.0
      %1087 = vmatprep.subr.mxu0 0.0
      %1088 = vmatpush1.msra.mxu0 0.0
      %1089 = vmatprep.subr.mxu0 0.0
      %1090 = vmatpush1.msra.mxu0 0.0
      %1091 = vmatprep.subr.mxu0 0.0
      %1092 = vmatpush1.msra.mxu0 0.0
      %1093 = vmatprep.subr.mxu0 0.0
      %1094 = vmatpush1.msra.mxu0 0.0
      %1095 = vmatprep.subr.mxu0 0.0
      %1096 = vmatpush1.msra.mxu0 0.0
      %1097 = vmatprep.subr.mxu0 0.0
      %1098 = vmatpush1.msra.mxu0 0.0
      %1099 = vmatprep.subr.mxu0 0.0
      %1100 = vmatpush1.msra.mxu0 0.0
      %1101 = vmatprep.subr.mxu0 0.0
      %1102 = vmatpush1.msra.mxu0 0.0
      %1103 = vmatprep.subr.mxu0 0.0
      %1104 = vmatpush1.msra.mxu0 0.0
      %1105 = vmatprep.subr.mxu0 0.0
      %1106 = vmatpush1.msra.mxu0 0.0
      %1107 = vmatprep.subr.mxu0 0.0
      %1108 = vmatpush1.msra.mxu0 0.0
      %1109 = vmatprep.subr.mxu0 0.0
      %1110 = vmatpush1.msra.mxu0 0.0
      %1111 = vmatprep.subr.mxu0 0.0
      %1112 = vmatpush1.msra.mxu0 0.0
      %1113 = vmatprep.subr.mxu0 0.0
      %1114 = vmatpush1.msra.mxu0 0.0
      %1115 = vmatprep.subr.mxu0 0.0
      %1116 = vmatpush1.msra.mxu0 0.0
      %1117 = vmatprep.subr.mxu0 0.0
      %1118 = vmatpush1.msra.mxu0 0.0
      %1119 = vmatprep.subr.mxu0 0.0
      %1120 = vmatpush1.msra.mxu0 0.0
      %1121 = vmatprep.subr.mxu0 0.0
      %1122 = vmatpush1.msra.mxu0 0.0
      %1123 = vmatprep.subr.mxu0 0.0
      %1124 = vmatpush1.msra.mxu0 0.0
      %1125 = vmatprep.subr.mxu0 0.0
      %1126 = vmatpush1.msra.mxu0 0.0
      %1127 = vmatprep.mubr.f32.mxu0 0.0
      %1128 = vmatmul.mubr.f32.gmra.mrb[0].mxu0 %v1061
      %v1129 = vpop.f32.mrb[0].mxu0
      %v1130 = vadd.f32 %v1057, %v1129
      %v1131 = vpop.f32.mrb[0].mxu0
      %1132 = vdwg.mxu0
      %vm1133 = vcmask 24576
      %1134 = vst.msk [vmem:[%s139] sm:$0x1] %vm1133, %v1130
      %p1135 = scmp.lt.s32.totalorder %s13, 7
      %s1136 = scalar_select %p1135, %s13, 7
      %s1137 = scalar_lea.vmem %s2, %s1136
      // Predicated region
      $region29: #{daum1_forward.1} parent=27 // pred_check
        %p1138 = pneg %p78
      $region30: #{daum1_forward.1} parent=27 // pred_check_branch
        %1140 = sbr.rel (%p1138) target = $region32
      $region31: #{daum1_forward.1} parent=27 // pred_region
        _
      $region32: #{daum1_forward.1} parent=27 // pred_fallthru
        _
    $region28: #{daum1_forward.1} parent=5 // pred_fallthru
      _
    %p1141 = scmp.le.s32.totalorder 2, %s8
    // Predicated region
    $region33: #{daum1_forward.1} parent=5 // pred_check
      %p1142 = pneg %p1141
    $region34: #{daum1_forward.1} parent=5 // pred_check_branch
      %1144 = sbr.rel (%p1142) target = $region36
    $region35: #{daum1_forward.1} parent=5 // pred_region
      %s1145 = ssub.s32 %s8, 2
      // Predicated region
      $region37: #{daum1_forward.1} parent=35 // pred_check
        %p1146 = pneg %p84
      $region38: #{daum1_forward.1} parent=35 // pred_check_branch
        %1148 = sbr.rel (%p1146) target = $region40
      $region39: #{daum1_forward.1} parent=35 // pred_region
        %p1149 = scmp.lt.s32.totalorder %s14, 7
        %s1150 = scalar_select %p1149, %s14, 7
        %s1151 = scalar_lea.vmem %s2, %s1150
      $region40: #{daum1_forward.1} parent=35 // pred_fallthru
        _
    $region36: #{daum1_forward.1} parent=5 // pred_fallthru
      _
  $region6: #{daum1_forward.1} parent=0 // loop_footer
    %s12 = sadd.s32 1, %s8
  $region7: #{daum1_forward.1} parent=0 // loop_footer_branch
    %7 = sbr.rel target = $region3
  $region8: #{daum1_forward.1} parent=0 // loop_exit
    _

</llo_original>
